<compile_context>
chip_gen: v7x
topology: tpu7x:2x2x1
jax: 0.10.0
libtpu: 0.0.40
codegen_flags: <defaults>
</compile_context>

<pallas_src>
import functools

import jax
import jax.numpy as jnp
from jax.experimental import pallas as pl
from jax.experimental.pallas import tpu as pltpu


def _round_up(a, m):
    return (a + m - 1) // m * m


def wd_block_kernel(x_ref, mask_ref, w1_ref, w2_ref, o_ref, s1_ref, s2_ref,
                    *, nb, shifts):
    # x_ref   : (1, NB*C, HW) f32   NB images stacked along sublanes
    # mask_ref: (9, 1, HW)    f32   {0,1} SAME-padding border masks (resident)
    # w1_ref  : (C3, KP1)     cdt   conv1 weights as (Cout, 9*Cin)+bias col+pad
    # w2_ref  : (C,  KP2)     cdt   conv2 weights likewise
    # o_ref   : (1, NB*C, HW) f32
    # s1_ref  : (KP1, HW)     cdt   stacked-tap scratch for conv1
    # s2_ref  : (KP2, HW)     cdt   stacked-tap scratch for conv2
    HW = x_ref.shape[-1]
    C3 = w1_ref.shape[0]
    C = w2_ref.shape[0]
    kp1 = s1_ref.shape[0]
    kp2 = s2_ref.shape[0]
    cdt = s1_ref.dtype

    # Rows past the 9 taps hold the folded-bias "ones" row plus alignment
    # padding (their weight columns are zero, so ones are harmless).  They are
    # rewritten every step on purpose: scratch is per-core, so a
    # program_id(0)==0 guard would be wrong if the parallel batch axis gets
    # sharded across TensorCores.
    s1_ref[9 * C:kp1, :] = jnp.ones((kp1 - 9 * C, HW), cdt)
    s2_ref[9 * C3:kp2, :] = jnp.ones((kp2 - 9 * C3, HW), cdt)

    w1 = w1_ref[...]                       # (C3, KP1)  resident, tiny
    w2 = w2_ref[...]                       # (C,  KP2)

    def stack_taps(inp, s_ref, cin):
        # Write the 9 shifted+masked copies of `inp` (cin, HW) row-wise into
        # the stacked-tap scratch.  pltpu.roll keeps the shift on the XLU and
        # the {0,1} border-mask multiply on the VPU; both overlap MXU/DMA.
        for k, d in enumerate(shifts):
            rolled = inp if d == 0 else pltpu.roll(inp, (-d) % HW, axis=1)
            s_ref[k * cin:(k + 1) * cin, :] = (rolled * mask_ref[k]).astype(cdt)

    for i in range(nb):                                   # static unroll
        xi = x_ref[0, i * C:(i + 1) * C, :]               # (C, HW) f32
        stack_taps(xi, s1_ref, C)
        hid = jnp.dot(w1, s1_ref[...],                    # one MXU pass, f32 acc
                      preferred_element_type=jnp.float32)
        hid = jnp.maximum(hid, 0.0)                       # ReLU (f32)
        stack_taps(hid, s2_ref, C3)
        res = jnp.dot(w2, s2_ref[...],
                      preferred_element_type=jnp.float32)
        o_ref[0, i * C:(i + 1) * C, :] = (res + xi).astype(o_ref.dtype)


def _border_masks(H, W):
    """{0,1} validity masks (9, 1, H*W) for the 9 taps of a 3x3 SAME conv."""
    idx = jnp.arange(H * W, dtype=jnp.int32)
    row, col = idx // W, idx % W
    full = jnp.ones((H * W,), dtype=bool)
    row_ok = {-1: row >= 1, 0: full, 1: row <= H - 2}
    col_ok = {-1: col >= 1, 0: full, 1: col <= W - 2}
    m = jnp.stack([(row_ok[oh] & col_ok[ow]).astype(jnp.float32)
                   for oh in (-1, 0, 1) for ow in (-1, 0, 1)])
    return m.reshape(9, 1, H * W)


def _fold_weight(w_oihw, b, mxu_dtype):
    """OIHW 3x3 weights + bias -> (Cout, round_up(9*Cin + 1, 16)) matrix.

    Column block [k*Cin:(k+1)*Cin) is tap k = kh*3 + kw; column 9*Cin is the
    bias (paired with the ones-row of the stacked-tap scratch); the remaining
    columns are zero padding for an MXU-friendly contraction depth.
    """
    co, ci = w_oihw.shape[0], w_oihw.shape[1]
    wt = jnp.transpose(w_oihw, (0, 2, 3, 1)).reshape(co, 9 * ci)
    kp = _round_up(9 * ci + 1, 16)
    wf = jnp.zeros((co, kp), jnp.float32)
    wf = wf.at[:, :9 * ci].set(wt)
    wf = wf.at[:, 9 * ci].set(b)
    return wf.astype(mxu_dtype)


def _pick_images_per_block(N, C, HW, itemsize=4, target_block_bytes=2 << 20):
    """Images per grid step: prefer big DMA blocks and full 8-sublane tiles,
    but keep >=2 parallel grid steps when N >= 2 so both v7x TensorCores get
    work (v5e/v6e are single-TC and simply see fewer, larger steps)."""
    feasible = []
    for nb in range(1, N + 1):
        if N % nb:
            continue
        if N >= 2 and N // nb < 2:
            continue
        if nb * C * HW * itemsize > target_block_bytes:
            continue
        feasible.append(nb)
    if not feasible:
        return 1
    full_sublane = [nb for nb in feasible if (nb * C) % 8 == 0]
    return max(full_sublane) if full_sublane else max(feasible)


def wd_block(x_nchw, w1_oihw, b1, w2_oihw, b2, *, mxu_dtype=jnp.bfloat16):
    """WD_Block forward.  x_nchw: (N, C, H, W) f32; weights in PyTorch OIHW."""
    N, C, H, W = x_nchw.shape
    C3 = w1_oihw.shape[0]
    HW = H * W
    assert HW % 128 == 0, "H*W must be a multiple of 128 for lane-dense tiles"
    # TODO(synk): for general H*W, pad to a multiple of 128 in the wrapper and
    # zero the padded tail via the masks so nothing leaks through conv2.

    nb = _pick_images_per_block(N, C, HW)
    x = x_nchw.reshape(N // nb, nb * C, HW)          # pure reshape, no transpose

    w1f = _fold_weight(w1_oihw, b1, mxu_dtype)       # (C3, KP1)
    w2f = _fold_weight(w2_oihw, b2, mxu_dtype)       # (C,  KP2)
    kp1, kp2 = w1f.shape[1], w2f.shape[1]
    masks = _border_masks(H, W)                      # (9, 1, HW) f32, hoisted
    shifts = tuple(oh * W + ow for oh in (-1, 0, 1) for ow in (-1, 0, 1))

    itemsize = jnp.dtype(mxu_dtype).itemsize
    cost = pl.CostEstimate(
        flops=2 * N * HW * (C3 * kp1 + C * kp2),
        transcendentals=0,
        bytes_accessed=(2 * N * C * HW + 9 * HW) * 4
        + (C3 * kp1 + C * kp2) * itemsize,
    )

    # Per-step VMEM live set: double-buffered in/out blocks (f32), resident
    # masks/weights, the two stacked-tap scratches, and f32 temporaries.
    # v7x only has 64 MiB of VMEM (32 MiB scoped default), so cap the request.
    est = (4 * nb * C * HW * 4                 # in + out blocks, double-buffered
           + (kp1 + kp2) * HW * itemsize       # stacked-tap scratches
           + 9 * HW * 4                        # masks
           + (C3 * kp1 + C * kp2) * itemsize   # weights
           + 6 * C3 * HW * 4)                  # f32 temporaries headroom
    vmem_limit = int(min(max(2 * est, 32 << 20), 64 << 20))

    out = pl.pallas_call(
        functools.partial(wd_block_kernel, nb=nb, shifts=shifts),
        out_shape=jax.ShapeDtypeStruct((N // nb, nb * C, HW), x_nchw.dtype),
        grid_spec=pltpu.PrefetchScalarGridSpec(
            num_scalar_prefetch=0,
            grid=(N // nb,),
            in_specs=[
                pl.BlockSpec((1, nb * C, HW), lambda n: (n, 0, 0)),
                pl.BlockSpec((9, 1, HW), lambda n: (0, 0, 0)),   # resident
                pl.BlockSpec((C3, kp1), lambda n: (0, 0)),       # resident
                pl.BlockSpec((C, kp2), lambda n: (0, 0)),        # resident
            ],
            out_specs=pl.BlockSpec((1, nb * C, HW), lambda n: (n, 0, 0)),
            scratch_shapes=[
                pltpu.VMEM((kp1, HW), mxu_dtype),
                pltpu.VMEM((kp2, HW), mxu_dtype),
            ],
        ),
        compiler_params=pltpu.CompilerParams(
            dimension_semantics=("parallel",),
            vmem_limit_bytes=vmem_limit,
        ),
        cost_estimate=cost,
    )(x, masks, w1f, w2f)

    return out.reshape(N, C, H, W)                   # pure reshape back to NCHW


def apply_weight_norm(v, g):
    # PyTorch weight_norm (dim=0): w[o] = g[o] * v[o] / ||v[o]||_2
    norm = jnp.sqrt(jnp.sum(v * v, axis=(1, 2, 3), keepdims=True))
    return (g / norm) * v


def reference(x, w1, b1, w2, b2):
    dn = ("NCHW", "OIHW", "NCHW")
    y = jax.lax.conv_general_dilated(x, w1, (1, 1), "SAME",
                                     dimension_numbers=dn)
    y = y + b1[None, :, None, None]
    y = jnp.maximum(y, 0.0)
    y = jax.lax.conv_general_dilated(y, w2, (1, 1), "SAME",
                                     dimension_numbers=dn)
    y = y + b2[None, :, None, None]
    return y + x


if __name__ == "__main__":
    nf = 4                      # small channel count for the example
    N, H, W = 2, 16, 16

    key = jax.random.PRNGKey(0)
    kx, kv1, kg1, kb1, kv2, kg2, kb2 = jax.random.split(key, 7)

    x = jax.random.normal(kx, (N, nf, H, W), dtype=jnp.float32)

    # conv1: nf -> 3*nf, 3x3   (weight_norm parameterization: v, g)
    v1 = jax.random.normal(kv1, (nf * 3, nf, 3, 3), jnp.float32) * 0.1
    g1 = jax.random.normal(kg1, (nf * 3, 1, 1, 1), jnp.float32) * 0.5 + 1.0
    b1 = jax.random.normal(kb1, (nf * 3,), jnp.float32) * 0.1
    # conv2: 3*nf -> nf, 3x3
    v2 = jax.random.normal(kv2, (nf, nf * 3, 3, 3), jnp.float32) * 0.1
    g2 = jax.random.normal(kg2, (nf, 1, 1, 1), jnp.float32) * 0.5 + 1.0
    b2 = jax.random.normal(kb2, (nf,), jnp.float32) * 0.1

    w1 = apply_weight_norm(v1, g1)
    w2 = apply_weight_norm(v2, g2)

    ref = jax.block_until_ready(reference(x, w1, b1, w2, b2))

    # Recommended fast path: bf16 MXU operands, f32 accumulation & residual.
    out = jax.block_until_ready(
        wd_block(x, w1, b1, w2, b2, mxu_dtype=jnp.bfloat16))
    assert out.shape == (N, nf, H, W)
    # bf16 operand rounding (accumulation stays f32) gives ~1e-2 worst-case
    # absolute error at these activation scales.
    assert jnp.allclose(out, ref, atol=3e-2, rtol=3e-2), \
        float(jnp.max(jnp.abs(out - ref)))

    # Exact path (f32 MXU operands) validates the roll/mask/fused-matmul
    # structure at tight tolerance.
    out_f32 = jax.block_until_ready(
        wd_block(x, w1, b1, w2, b2, mxu_dtype=jnp.float32))
    assert jnp.allclose(out_f32, ref, atol=1e-3, rtol=1e-3), \
        float(jnp.max(jnp.abs(out_f32 - ref)))

    print("KERNEL_OK")
</pallas_src>

<mosaic_0001>
module attributes {stable_mosaic.version = 11 : i64} {
  func.func @wd_block_kernel(%arg0: i32, %arg1: memref<1x4x256xf32, #tpu.memory_space<vmem>>, %arg2: memref<9x1x256xf32, #tpu.memory_space<vmem>>, %arg3: memref<12x48xbf16, #tpu.memory_space<vmem>>, %arg4: memref<4x112xbf16, #tpu.memory_space<vmem>>, %arg5: memref<1x4x256xf32, #tpu.memory_space<vmem>>, %arg6: memref<48x256xbf16, #tpu.memory_space<vmem>>, %arg7: memref<112x256xbf16, #tpu.memory_space<vmem>>) attributes {dimension_semantics = [#tpu.dimension_semantics<parallel>], iteration_bounds = array<i64: 2>, scalar_prefetch = 0 : i64, scratch_operands = 2 : i64, tpu.core_type = #tpu.core_type<tc>, window_params = [{transform_indices = @transform_0, window_bounds = array<i64: 1, 4, 256>}, {pipeline_mode = #tpu.pipeline_mode<synchronous>, transform_indices = @transform_1, window_bounds = array<i64: 9, 1, 256>}, {pipeline_mode = #tpu.pipeline_mode<synchronous>, transform_indices = @transform_2, window_bounds = array<i64: 12, 48>}, {pipeline_mode = #tpu.pipeline_mode<synchronous>, transform_indices = @transform_3, window_bounds = array<i64: 4, 112>}, {transform_indices = @transform_4, window_bounds = array<i64: 1, 4, 256>}]} {
    %cst = arith.constant 1.000000e+00 : bf16
    %0 = vector.broadcast %cst : bf16 to vector<12x256xbf16>
    %c36 = arith.constant 36 : index
    %c0 = arith.constant 0 : index
    %1 = vector.load %arg6[%c36, %c0] : memref<48x256xbf16, #tpu.memory_space<vmem>>, vector<12x256xbf16>
    tpu.vector_store %arg6[%c36, %c0], %0 {strides = array<i32>} : memref<48x256xbf16, #tpu.memory_space<vmem>>, vector<12x256xbf16>,
    %cst_0 = arith.constant 1.000000e+00 : bf16
    %2 = vector.broadcast %cst_0 : bf16 to vector<4x256xbf16>
    %c108 = arith.constant 108 : index
    %c0_1 = arith.constant 0 : index
    %3 = vector.load %arg7[%c108, %c0_1] : memref<112x256xbf16, #tpu.memory_space<vmem>>, vector<4x256xbf16>
    tpu.vector_store %arg7[%c108, %c0_1], %2 {strides = array<i32>} : memref<112x256xbf16, #tpu.memory_space<vmem>>, vector<4x256xbf16>,
    %c0_2 = arith.constant 0 : index
    %c0_3 = arith.constant 0 : index
    %4 = vector.load %arg3[%c0_2, %c0_3] : memref<12x48xbf16, #tpu.memory_space<vmem>>, vector<12x48xbf16>
    %c0_4 = arith.constant 0 : index
    %c0_5 = arith.constant 0 : index
    %5 = vector.load %arg4[%c0_4, %c0_5] : memref<4x112xbf16, #tpu.memory_space<vmem>>, vector<4x112xbf16>
    %c0_6 = arith.constant 0 : index
    %c0_7 = arith.constant 0 : index
    %c0_8 = arith.constant 0 : index
    %6 = vector.load %arg1[%c0_6, %c0_7, %c0_8] : memref<1x4x256xf32, #tpu.memory_space<vmem>>, vector<1x4x256xf32>
    %7 = vector.shape_cast %6 : vector<1x4x256xf32> to vector<4x256xf32>
    %c17_i32 = arith.constant 17 : i32
    %8 = tpu.dynamic_rotate %7 by %c17_i32 dim 1 : vector<4x256xf32>, i32 -> vector<4x256xf32>
    %c0_9 = arith.constant 0 : index
    %c0_10 = arith.constant 0 : index
    %c0_11 = arith.constant 0 : index
    %9 = vector.load %arg2[%c0_9, %c0_10, %c0_11] : memref<9x1x256xf32, #tpu.memory_space<vmem>>, vector<1x1x256xf32>
    %10 = vector.shape_cast %9 : vector<1x1x256xf32> to vector<1x256xf32>
    %11 = vector.broadcast %10 : vector<1x256xf32> to vector<4x256xf32>
    %12 = arith.mulf %8, %11 : vector<4x256xf32>
    %13 = arith.truncf %12 : vector<4x256xf32> to vector<4x256xbf16>
    %c0_12 = arith.constant 0 : index
    %c0_13 = arith.constant 0 : index
    %14 = vector.load %arg6[%c0_12, %c0_13] : memref<48x256xbf16, #tpu.memory_space<vmem>>, vector<4x256xbf16>
    tpu.vector_store %arg6[%c0_12, %c0_13], %13 {strides = array<i32>} : memref<48x256xbf16, #tpu.memory_space<vmem>>, vector<4x256xbf16>,
    %c16_i32 = arith.constant 16 : i32
    %15 = tpu.dynamic_rotate %7 by %c16_i32 dim 1 : vector<4x256xf32>, i32 -> vector<4x256xf32>
    %c1 = arith.constant 1 : index
    %c0_14 = arith.constant 0 : index
    %c0_15 = arith.constant 0 : index
    %16 = vector.load %arg2[%c1, %c0_14, %c0_15] : memref<9x1x256xf32, #tpu.memory_space<vmem>>, vector<1x1x256xf32>
    %17 = vector.shape_cast %16 : vector<1x1x256xf32> to vector<1x256xf32>
    %18 = vector.broadcast %17 : vector<1x256xf32> to vector<4x256xf32>
    %19 = arith.mulf %15, %18 : vector<4x256xf32>
    %20 = arith.truncf %19 : vector<4x256xf32> to vector<4x256xbf16>
    %c4 = arith.constant 4 : index
    %c0_16 = arith.constant 0 : index
    %21 = vector.load %arg6[%c4, %c0_16] : memref<48x256xbf16, #tpu.memory_space<vmem>>, vector<4x256xbf16>
    tpu.vector_store %arg6[%c4, %c0_16], %20 {strides = array<i32>} : memref<48x256xbf16, #tpu.memory_space<vmem>>, vector<4x256xbf16>,
    %c15_i32 = arith.constant 15 : i32
    %22 = tpu.dynamic_rotate %7 by %c15_i32 dim 1 : vector<4x256xf32>, i32 -> vector<4x256xf32>
    %c2 = arith.constant 2 : index
    %c0_17 = arith.constant 0 : index
    %c0_18 = arith.constant 0 : index
    %23 = vector.load %arg2[%c2, %c0_17, %c0_18] : memref<9x1x256xf32, #tpu.memory_space<vmem>>, vector<1x1x256xf32>
    %24 = vector.shape_cast %23 : vector<1x1x256xf32> to vector<1x256xf32>
    %25 = vector.broadcast %24 : vector<1x256xf32> to vector<4x256xf32>
    %26 = arith.mulf %22, %25 : vector<4x256xf32>
    %27 = arith.truncf %26 : vector<4x256xf32> to vector<4x256xbf16>
    %c8 = arith.constant 8 : index
    %c0_19 = arith.constant 0 : index
    %28 = vector.load %arg6[%c8, %c0_19] : memref<48x256xbf16, #tpu.memory_space<vmem>>, vector<4x256xbf16>
    tpu.vector_store %arg6[%c8, %c0_19], %27 {strides = array<i32>} : memref<48x256xbf16, #tpu.memory_space<vmem>>, vector<4x256xbf16>,
    %c1_i32 = arith.constant 1 : i32
    %29 = tpu.dynamic_rotate %7 by %c1_i32 dim 1 : vector<4x256xf32>, i32 -> vector<4x256xf32>
    %c3 = arith.constant 3 : index
    %c0_20 = arith.constant 0 : index
    %c0_21 = arith.constant 0 : index
    %30 = vector.load %arg2[%c3, %c0_20, %c0_21] : memref<9x1x256xf32, #tpu.memory_space<vmem>>, vector<1x1x256xf32>
    %31 = vector.shape_cast %30 : vector<1x1x256xf32> to vector<1x256xf32>
    %32 = vector.broadcast %31 : vector<1x256xf32> to vector<4x256xf32>
    %33 = arith.mulf %29, %32 : vector<4x256xf32>
    %34 = arith.truncf %33 : vector<4x256xf32> to vector<4x256xbf16>
    %c12 = arith.constant 12 : index
    %c0_22 = arith.constant 0 : index
    %35 = vector.load %arg6[%c12, %c0_22] : memref<48x256xbf16, #tpu.memory_space<vmem>>, vector<4x256xbf16>
    tpu.vector_store %arg6[%c12, %c0_22], %34 {strides = array<i32>} : memref<48x256xbf16, #tpu.memory_space<vmem>>, vector<4x256xbf16>,
    %c4_23 = arith.constant 4 : index
    %c0_24 = arith.constant 0 : index
    %c0_25 = arith.constant 0 : index
    %36 = vector.load %arg2[%c4_23, %c0_24, %c0_25] : memref<9x1x256xf32, #tpu.memory_space<vmem>>, vector<1x1x256xf32>
    %37 = vector.shape_cast %36 : vector<1x1x256xf32> to vector<1x256xf32>
    %38 = vector.broadcast %37 : vector<1x256xf32> to vector<4x256xf32>
    %39 = arith.mulf %7, %38 : vector<4x256xf32>
    %40 = arith.truncf %39 : vector<4x256xf32> to vector<4x256xbf16>
    %c16 = arith.constant 16 : index
    %c0_26 = arith.constant 0 : index
    %41 = vector.load %arg6[%c16, %c0_26] : memref<48x256xbf16, #tpu.memory_space<vmem>>, vector<4x256xbf16>
    tpu.vector_store %arg6[%c16, %c0_26], %40 {strides = array<i32>} : memref<48x256xbf16, #tpu.memory_space<vmem>>, vector<4x256xbf16>,
    %c255_i32 = arith.constant 255 : i32
    %42 = tpu.dynamic_rotate %7 by %c255_i32 dim 1 : vector<4x256xf32>, i32 -> vector<4x256xf32>
    %c5 = arith.constant 5 : index
    %c0_27 = arith.constant 0 : index
    %c0_28 = arith.constant 0 : index
    %43 = vector.load %arg2[%c5, %c0_27, %c0_28] : memref<9x1x256xf32, #tpu.memory_space<vmem>>, vector<1x1x256xf32>
    %44 = vector.shape_cast %43 : vector<1x1x256xf32> to vector<1x256xf32>
    %45 = vector.broadcast %44 : vector<1x256xf32> to vector<4x256xf32>
    %46 = arith.mulf %42, %45 : vector<4x256xf32>
    %47 = arith.truncf %46 : vector<4x256xf32> to vector<4x256xbf16>
    %c20 = arith.constant 20 : index
    %c0_29 = arith.constant 0 : index
    %48 = vector.load %arg6[%c20, %c0_29] : memref<48x256xbf16, #tpu.memory_space<vmem>>, vector<4x256xbf16>
    tpu.vector_store %arg6[%c20, %c0_29], %47 {strides = array<i32>} : memref<48x256xbf16, #tpu.memory_space<vmem>>, vector<4x256xbf16>,
    %c241_i32 = arith.constant 241 : i32
    %49 = tpu.dynamic_rotate %7 by %c241_i32 dim 1 : vector<4x256xf32>, i32 -> vector<4x256xf32>
    %c6 = arith.constant 6 : index
    %c0_30 = arith.constant 0 : index
    %c0_31 = arith.constant 0 : index
    %50 = vector.load %arg2[%c6, %c0_30, %c0_31] : memref<9x1x256xf32, #tpu.memory_space<vmem>>, vector<1x1x256xf32>
    %51 = vector.shape_cast %50 : vector<1x1x256xf32> to vector<1x256xf32>
    %52 = vector.broadcast %51 : vector<1x256xf32> to vector<4x256xf32>
    %53 = arith.mulf %49, %52 : vector<4x256xf32>
    %54 = arith.truncf %53 : vector<4x256xf32> to vector<4x256xbf16>
    %c24 = arith.constant 24 : index
    %c0_32 = arith.constant 0 : index
    %55 = vector.load %arg6[%c24, %c0_32] : memref<48x256xbf16, #tpu.memory_space<vmem>>, vector<4x256xbf16>
    tpu.vector_store %arg6[%c24, %c0_32], %54 {strides = array<i32>} : memref<48x256xbf16, #tpu.memory_space<vmem>>, vector<4x256xbf16>,
    %c240_i32 = arith.constant 240 : i32
    %56 = tpu.dynamic_rotate %7 by %c240_i32 dim 1 : vector<4x256xf32>, i32 -> vector<4x256xf32>
    %c7 = arith.constant 7 : index
    %c0_33 = arith.constant 0 : index
    %c0_34 = arith.constant 0 : index
    %57 = vector.load %arg2[%c7, %c0_33, %c0_34] : memref<9x1x256xf32, #tpu.memory_space<vmem>>, vector<1x1x256xf32>
    %58 = vector.shape_cast %57 : vector<1x1x256xf32> to vector<1x256xf32>
    %59 = vector.broadcast %58 : vector<1x256xf32> to vector<4x256xf32>
    %60 = arith.mulf %56, %59 : vector<4x256xf32>
    %61 = arith.truncf %60 : vector<4x256xf32> to vector<4x256xbf16>
    %c28 = arith.constant 28 : index
    %c0_35 = arith.constant 0 : index
    %62 = vector.load %arg6[%c28, %c0_35] : memref<48x256xbf16, #tpu.memory_space<vmem>>, vector<4x256xbf16>
    tpu.vector_store %arg6[%c28, %c0_35], %61 {strides = array<i32>} : memref<48x256xbf16, #tpu.memory_space<vmem>>, vector<4x256xbf16>,
    %c239_i32 = arith.constant 239 : i32
    %63 = tpu.dynamic_rotate %7 by %c239_i32 dim 1 : vector<4x256xf32>, i32 -> vector<4x256xf32>
    %c8_36 = arith.constant 8 : index
    %c0_37 = arith.constant 0 : index
    %c0_38 = arith.constant 0 : index
    %64 = vector.load %arg2[%c8_36, %c0_37, %c0_38] : memref<9x1x256xf32, #tpu.memory_space<vmem>>, vector<1x1x256xf32>
    %65 = vector.shape_cast %64 : vector<1x1x256xf32> to vector<1x256xf32>
    %66 = vector.broadcast %65 : vector<1x256xf32> to vector<4x256xf32>
    %67 = arith.mulf %63, %66 : vector<4x256xf32>
    %68 = arith.truncf %67 : vector<4x256xf32> to vector<4x256xbf16>
    %c32 = arith.constant 32 : index
    %c0_39 = arith.constant 0 : index
    %69 = vector.load %arg6[%c32, %c0_39] : memref<48x256xbf16, #tpu.memory_space<vmem>>, vector<4x256xbf16>
    tpu.vector_store %arg6[%c32, %c0_39], %68 {strides = array<i32>} : memref<48x256xbf16, #tpu.memory_space<vmem>>, vector<4x256xbf16>,
    %c0_40 = arith.constant 0 : index
    %c0_41 = arith.constant 0 : index
    %70 = vector.load %arg6[%c0_40, %c0_41] : memref<48x256xbf16, #tpu.memory_space<vmem>>, vector<48x256xbf16>
    %cst_42 = arith.constant dense<0.000000e+00> : vector<12x256xf32>
    %71 = tpu.matmul %4, %70, %cst_42 {dimension_numbers = #tpu.dot_dimension_numbers<[1], [0], [0], [1], [0, 0, 1, 1], [], []>} : vector<12x48xbf16>, vector<48x256xbf16>, vector<12x256xf32> -> vector<12x256xf32>
    %cst_43 = arith.constant 0.000000e+00 : f32
    %72 = vector.broadcast %cst_43 : f32 to vector<12x256xf32>
    %73 = arith.maximumf %71, %72 : vector<12x256xf32>
    %c17_i32_44 = arith.constant 17 : i32
    %74 = tpu.dynamic_rotate %73 by %c17_i32_44 dim 1 : vector<12x256xf32>, i32 -> vector<12x256xf32>
    %c0_45 = arith.constant 0 : index
    %c0_46 = arith.constant 0 : index
    %c0_47 = arith.constant 0 : index
    %75 = vector.load %arg2[%c0_45, %c0_46, %c0_47] : memref<9x1x256xf32, #tpu.memory_space<vmem>>, vector<1x1x256xf32>
    %76 = vector.shape_cast %75 : vector<1x1x256xf32> to vector<1x256xf32>
    %77 = vector.broadcast %76 : vector<1x256xf32> to vector<12x256xf32>
    %78 = arith.mulf %74, %77 : vector<12x256xf32>
    %79 = arith.truncf %78 : vector<12x256xf32> to vector<12x256xbf16>
    %c0_48 = arith.constant 0 : index
    %c0_49 = arith.constant 0 : index
    %80 = vector.load %arg7[%c0_48, %c0_49] : memref<112x256xbf16, #tpu.memory_space<vmem>>, vector<12x256xbf16>
    tpu.vector_store %arg7[%c0_48, %c0_49], %79 {strides = array<i32>} : memref<112x256xbf16, #tpu.memory_space<vmem>>, vector<12x256xbf16>,
    %c16_i32_50 = arith.constant 16 : i32
    %81 = tpu.dynamic_rotate %73 by %c16_i32_50 dim 1 : vector<12x256xf32>, i32 -> vector<12x256xf32>
    %c1_51 = arith.constant 1 : index
    %c0_52 = arith.constant 0 : index
    %c0_53 = arith.constant 0 : index
    %82 = vector.load %arg2[%c1_51, %c0_52, %c0_53] : memref<9x1x256xf32, #tpu.memory_space<vmem>>, vector<1x1x256xf32>
    %83 = vector.shape_cast %82 : vector<1x1x256xf32> to vector<1x256xf32>
    %84 = vector.broadcast %83 : vector<1x256xf32> to vector<12x256xf32>
    %85 = arith.mulf %81, %84 : vector<12x256xf32>
    %86 = arith.truncf %85 : vector<12x256xf32> to vector<12x256xbf16>
    %c12_54 = arith.constant 12 : index
    %c0_55 = arith.constant 0 : index
    %87 = vector.load %arg7[%c12_54, %c0_55] : memref<112x256xbf16, #tpu.memory_space<vmem>>, vector<12x256xbf16>
    tpu.vector_store %arg7[%c12_54, %c0_55], %86 {strides = array<i32>} : memref<112x256xbf16, #tpu.memory_space<vmem>>, vector<12x256xbf16>,
    %c15_i32_56 = arith.constant 15 : i32
    %88 = tpu.dynamic_rotate %73 by %c15_i32_56 dim 1 : vector<12x256xf32>, i32 -> vector<12x256xf32>
    %c2_57 = arith.constant 2 : index
    %c0_58 = arith.constant 0 : index
    %c0_59 = arith.constant 0 : index
    %89 = vector.load %arg2[%c2_57, %c0_58, %c0_59] : memref<9x1x256xf32, #tpu.memory_space<vmem>>, vector<1x1x256xf32>
    %90 = vector.shape_cast %89 : vector<1x1x256xf32> to vector<1x256xf32>
    %91 = vector.broadcast %90 : vector<1x256xf32> to vector<12x256xf32>
    %92 = arith.mulf %88, %91 : vector<12x256xf32>
    %93 = arith.truncf %92 : vector<12x256xf32> to vector<12x256xbf16>
    %c24_60 = arith.constant 24 : index
    %c0_61 = arith.constant 0 : index
    %94 = vector.load %arg7[%c24_60, %c0_61] : memref<112x256xbf16, #tpu.memory_space<vmem>>, vector<12x256xbf16>
    tpu.vector_store %arg7[%c24_60, %c0_61], %93 {strides = array<i32>} : memref<112x256xbf16, #tpu.memory_space<vmem>>, vector<12x256xbf16>,
    %c1_i32_62 = arith.constant 1 : i32
    %95 = tpu.dynamic_rotate %73 by %c1_i32_62 dim 1 : vector<12x256xf32>, i32 -> vector<12x256xf32>
    %c3_63 = arith.constant 3 : index
    %c0_64 = arith.constant 0 : index
    %c0_65 = arith.constant 0 : index
    %96 = vector.load %arg2[%c3_63, %c0_64, %c0_65] : memref<9x1x256xf32, #tpu.memory_space<vmem>>, vector<1x1x256xf32>
    %97 = vector.shape_cast %96 : vector<1x1x256xf32> to vector<1x256xf32>
    %98 = vector.broadcast %97 : vector<1x256xf32> to vector<12x256xf32>
    %99 = arith.mulf %95, %98 : vector<12x256xf32>
    %100 = arith.truncf %99 : vector<12x256xf32> to vector<12x256xbf16>
    %c36_66 = arith.constant 36 : index
    %c0_67 = arith.constant 0 : index
    %101 = vector.load %arg7[%c36_66, %c0_67] : memref<112x256xbf16, #tpu.memory_space<vmem>>, vector<12x256xbf16>
    tpu.vector_store %arg7[%c36_66, %c0_67], %100 {strides = array<i32>} : memref<112x256xbf16, #tpu.memory_space<vmem>>, vector<12x256xbf16>,
    %c4_68 = arith.constant 4 : index
    %c0_69 = arith.constant 0 : index
    %c0_70 = arith.constant 0 : index
    %102 = vector.load %arg2[%c4_68, %c0_69, %c0_70] : memref<9x1x256xf32, #tpu.memory_space<vmem>>, vector<1x1x256xf32>
    %103 = vector.shape_cast %102 : vector<1x1x256xf32> to vector<1x256xf32>
    %104 = vector.broadcast %103 : vector<1x256xf32> to vector<12x256xf32>
    %105 = arith.mulf %73, %104 : vector<12x256xf32>
    %106 = arith.truncf %105 : vector<12x256xf32> to vector<12x256xbf16>
    %c48 = arith.constant 48 : index
    %c0_71 = arith.constant 0 : index
    %107 = vector.load %arg7[%c48, %c0_71] : memref<112x256xbf16, #tpu.memory_space<vmem>>, vector<12x256xbf16>
    tpu.vector_store %arg7[%c48, %c0_71], %106 {strides = array<i32>} : memref<112x256xbf16, #tpu.memory_space<vmem>>, vector<12x256xbf16>,
    %c255_i32_72 = arith.constant 255 : i32
    %108 = tpu.dynamic_rotate %73 by %c255_i32_72 dim 1 : vector<12x256xf32>, i32 -> vector<12x256xf32>
    %c5_73 = arith.constant 5 : index
    %c0_74 = arith.constant 0 : index
    %c0_75 = arith.constant 0 : index
    %109 = vector.load %arg2[%c5_73, %c0_74, %c0_75] : memref<9x1x256xf32, #tpu.memory_space<vmem>>, vector<1x1x256xf32>
    %110 = vector.shape_cast %109 : vector<1x1x256xf32> to vector<1x256xf32>
    %111 = vector.broadcast %110 : vector<1x256xf32> to vector<12x256xf32>
    %112 = arith.mulf %108, %111 : vector<12x256xf32>
    %113 = arith.truncf %112 : vector<12x256xf32> to vector<12x256xbf16>
    %c60 = arith.constant 60 : index
    %c0_76 = arith.constant 0 : index
    %114 = vector.load %arg7[%c60, %c0_76] : memref<112x256xbf16, #tpu.memory_space<vmem>>, vector<12x256xbf16>
    tpu.vector_store %arg7[%c60, %c0_76], %113 {strides = array<i32>} : memref<112x256xbf16, #tpu.memory_space<vmem>>, vector<12x256xbf16>,
    %c241_i32_77 = arith.constant 241 : i32
    %115 = tpu.dynamic_rotate %73 by %c241_i32_77 dim 1 : vector<12x256xf32>, i32 -> vector<12x256xf32>
    %c6_78 = arith.constant 6 : index
    %c0_79 = arith.constant 0 : index
    %c0_80 = arith.constant 0 : index
    %116 = vector.load %arg2[%c6_78, %c0_79, %c0_80] : memref<9x1x256xf32, #tpu.memory_space<vmem>>, vector<1x1x256xf32>
    %117 = vector.shape_cast %116 : vector<1x1x256xf32> to vector<1x256xf32>
    %118 = vector.broadcast %117 : vector<1x256xf32> to vector<12x256xf32>
    %119 = arith.mulf %115, %118 : vector<12x256xf32>
    %120 = arith.truncf %119 : vector<12x256xf32> to vector<12x256xbf16>
    %c72 = arith.constant 72 : index
    %c0_81 = arith.constant 0 : index
    %121 = vector.load %arg7[%c72, %c0_81] : memref<112x256xbf16, #tpu.memory_space<vmem>>, vector<12x256xbf16>
    tpu.vector_store %arg7[%c72, %c0_81], %120 {strides = array<i32>} : memref<112x256xbf16, #tpu.memory_space<vmem>>, vector<12x256xbf16>,
    %c240_i32_82 = arith.constant 240 : i32
    %122 = tpu.dynamic_rotate %73 by %c240_i32_82 dim 1 : vector<12x256xf32>, i32 -> vector<12x256xf32>
    %c7_83 = arith.constant 7 : index
    %c0_84 = arith.constant 0 : index
    %c0_85 = arith.constant 0 : index
    %123 = vector.load %arg2[%c7_83, %c0_84, %c0_85] : memref<9x1x256xf32, #tpu.memory_space<vmem>>, vector<1x1x256xf32>
    %124 = vector.shape_cast %123 : vector<1x1x256xf32> to vector<1x256xf32>
    %125 = vector.broadcast %124 : vector<1x256xf32> to vector<12x256xf32>
    %126 = arith.mulf %122, %125 : vector<12x256xf32>
    %127 = arith.truncf %126 : vector<12x256xf32> to vector<12x256xbf16>
    %c84 = arith.constant 84 : index
    %c0_86 = arith.constant 0 : index
    %128 = vector.load %arg7[%c84, %c0_86] : memref<112x256xbf16, #tpu.memory_space<vmem>>, vector<12x256xbf16>
    tpu.vector_store %arg7[%c84, %c0_86], %127 {strides = array<i32>} : memref<112x256xbf16, #tpu.memory_space<vmem>>, vector<12x256xbf16>,
    %c239_i32_87 = arith.constant 239 : i32
    %129 = tpu.dynamic_rotate %73 by %c239_i32_87 dim 1 : vector<12x256xf32>, i32 -> vector<12x256xf32>
    %c8_88 = arith.constant 8 : index
    %c0_89 = arith.constant 0 : index
    %c0_90 = arith.constant 0 : index
    %130 = vector.load %arg2[%c8_88, %c0_89, %c0_90] : memref<9x1x256xf32, #tpu.memory_space<vmem>>, vector<1x1x256xf32>
    %131 = vector.shape_cast %130 : vector<1x1x256xf32> to vector<1x256xf32>
    %132 = vector.broadcast %131 : vector<1x256xf32> to vector<12x256xf32>
    %133 = arith.mulf %129, %132 : vector<12x256xf32>
    %134 = arith.truncf %133 : vector<12x256xf32> to vector<12x256xbf16>
    %c96 = arith.constant 96 : index
    %c0_91 = arith.constant 0 : index
    %135 = vector.load %arg7[%c96, %c0_91] : memref<112x256xbf16, #tpu.memory_space<vmem>>, vector<12x256xbf16>
    tpu.vector_store %arg7[%c96, %c0_91], %134 {strides = array<i32>} : memref<112x256xbf16, #tpu.memory_space<vmem>>, vector<12x256xbf16>,
    %c0_92 = arith.constant 0 : index
    %c0_93 = arith.constant 0 : index
    %136 = vector.load %arg7[%c0_92, %c0_93] : memref<112x256xbf16, #tpu.memory_space<vmem>>, vector<112x256xbf16>
    %cst_94 = arith.constant dense<0.000000e+00> : vector<4x256xf32>
    %137 = tpu.matmul %5, %136, %cst_94 {dimension_numbers = #tpu.dot_dimension_numbers<[1], [0], [0], [1], [0, 0, 1, 1], [], []>} : vector<4x112xbf16>, vector<112x256xbf16>, vector<4x256xf32> -> vector<4x256xf32>
    %138 = arith.addf %137, %7 : vector<4x256xf32>
    %c0_95 = arith.constant 0 : index
    %c0_96 = arith.constant 0 : index
    %c0_97 = arith.constant 0 : index
    %139 = vector.load %arg5[%c0_95, %c0_96, %c0_97] : memref<1x4x256xf32, #tpu.memory_space<vmem>>, vector<1x4x256xf32>
    %140 = vector.shape_cast %139 : vector<1x4x256xf32> to vector<4x256xf32>
    %141 = vector.shape_cast %138 : vector<4x256xf32> to vector<1x4x256xf32>
    tpu.vector_store %arg5[%c0_95, %c0_96, %c0_97], %141 {strides = array<i32>} : memref<1x4x256xf32, #tpu.memory_space<vmem>>, vector<1x4x256xf32>,
    return
  }
  func.func @transform_0(%arg0: i32) -> (i32, i32, i32) {
    %c0_i32 = arith.constant 0 : i32
    %c0_i32_0 = arith.constant 0 : i32
    %c0_i32_1 = arith.constant 0 : i32
    return %arg0, %c0_i32, %c0_i32_0 : i32, i32, i32
  }
  func.func @transform_1(%arg0: i32) -> (i32, i32, i32) {
    %c0_i32 = arith.constant 0 : i32
    %c0_i32_0 = arith.constant 0 : i32
    %c0_i32_1 = arith.constant 0 : i32
    %c0_i32_2 = arith.constant 0 : i32
    return %c0_i32, %c0_i32_0, %c0_i32_1 : i32, i32, i32
  }
  func.func @transform_2(%arg0: i32) -> (i32, i32) {
    %c0_i32 = arith.constant 0 : i32
    %c0_i32_0 = arith.constant 0 : i32
    %c0_i32_1 = arith.constant 0 : i32
    return %c0_i32, %c0_i32_0 : i32, i32
  }
  func.func @transform_3(%arg0: i32) -> (i32, i32) {
    %c0_i32 = arith.constant 0 : i32
    %c0_i32_0 = arith.constant 0 : i32
    %c0_i32_1 = arith.constant 0 : i32
    return %c0_i32, %c0_i32_0 : i32, i32
  }
  func.func @transform_4(%arg0: i32) -> (i32, i32, i32) {
    %c0_i32 = arith.constant 0 : i32
    %c0_i32_0 = arith.constant 0 : i32
    %c0_i32_1 = arith.constant 0 : i32
    return %arg0, %c0_i32, %c0_i32_0 : i32, i32, i32
  }
}

</mosaic_0001>

<llo_original>
// kernel: tpu_custom_call.1
$region0: #{tpu_custom_call.1}
  #allocation0 [shape = 'u32[]', space=smem, size = 0x4, offset = 0x4, fixed_abs, tag = 'smem constant byte address 0x4 - core index']
  #allocation1 [shape = 'u32[144,128]{1,0:T(1,128)}', space=vmem, size = 0x12000, scoped, tag = 'internal scratch']
  #allocation2 [shape = 'bf16[48,256]{1,0:T(16,128)(2,1)}', space=vmem, size = 0x6000, scoped, tag = 'scratch operand']
  #allocation3 [shape = 'bf16[112,256]{1,0:T(16,128)(2,1)}', space=vmem, size = 0xe000, scoped, tag = 'scratch operand']
  %s0 = inlined_call_operand.hbm [shape: f32[2,4,256], index: 0, kind: input, shape index: {}]
  %s1 = inlined_call_operand.hbm [shape: f32[9,1,256], index: 1, kind: input, shape index: {}]
  %s2 = inlined_call_operand.hbm [shape: bf16[12,48], index: 2, kind: input, shape index: {}]
  %s3 = inlined_call_operand.vmem [shape: bf16[4,112], index: 3, kind: input, shape index: {}]
  %s4 = inlined_call_operand.hbm [shape: f32[2,4,256], index: 4, kind: output, shape index: {}]
  %s5 = sld [smem:[#allocation0]]
  $region61: #{tpu_custom_call.1} parent=0
    _
  %s7 = ssub.s32 1, %s5
  %s8 = scalar_select 0, %s7, %s5
  $region1: #{tpu_custom_call.1} parent=0
    #allocation4 [shape = 'u8[8192]{0}', space=vmem, size = 0x2000, scoped, tag = 'input window, operand 0']
    #allocation5 [shape = 's32[2]{0}', space=sflag, size = 0x8, scoped, tag = 'scoped memory for tpu_custom_call.1']
    #allocation6 [shape = 's32[2]{0}', space=sflag, size = 0x8, scoped, tag = 'scoped memory for tpu_custom_call.1']
    #allocation7 [shape = 'u8[9216]{0}', space=vmem, size = 0x2400, scoped, tag = 'input window, operand 1, single buffered']
    #allocation8 [shape = 's32[1]{0}', space=sflag, size = 0x4, scoped, tag = 'scoped memory for tpu_custom_call.1']
    #allocation9 [shape = 'u8[4096]{0}', space=vmem, size = 0x1000, scoped, tag = 'input window, operand 2, single buffered']
    #allocation10 [shape = 'u8[8192]{0}', space=vmem, size = 0x2000, scoped, tag = 'output window, operand 0']
    %9 = vsyncpa [#allocation5], 0
    %s10 = scalar_lea.sflag [#allocation5], 1
    %11 = vsyncpa %s10, 0
    %12 = vsyncpa [#allocation8], 0
    %13 = vsyncpa [#allocation6], 0
    %s14 = scalar_lea.sflag [#allocation6], 1
    %15 = vsyncpa %s14, 0
    loop: start=0, step=1, limit=4
    $region2: #{tpu_custom_call.1} parent=1 // loop_pre_header
      _
    $region3: #{tpu_custom_call.1} parent=1 // loop_header
      %s17 = sphi 0, %s21
      %p18 = scmp.ge.s32.totalorder %s17, 4
      %s27 = sphi 0, %s29
      %s30 = sphi 0, %s27
      %s31 = sphi 0, %s30
      %s47 = sphi 0, %s31
      %s51 = sphi 0, %s51
      %s53 = sphi 0, %s51
      %s54 = sphi 0, %s53
      %s68 = sphi 0, %s54
      %s72 = sphi 0, %s72
      %s74 = sphi 0, %s72
      %s75 = sphi 0, %s74
      %s89 = sphi 0, %s75
      %s93 = sphi 0, %s93
      %s95 = sphi 0, %s93
      %s96 = sphi 0, %s95
      %s110 = sphi 0, %s96
      %s116 = sphi 0, %s118
      %s119 = sphi 0, %s116
      %s120 = sphi 0, %s119
      %s136 = sphi 0, %s120
    $region4: #{tpu_custom_call.1} parent=1 // loop_header_branch
      %20 = sbr.rel (%p18) target = $region8
    $region5: #{tpu_custom_call.1} parent=1 // loop_body
      %s22 = ssub.s32 %s17, 1
      %s23 = ssub.s32 %s17, 2
      %s24 = sadd.s32 %s17, 1
      %s25 = ssub.s32 %s17, %s24
      %p26 = scmp.eq.s32.totalorder %s25, 0
      %s28 = sadd.s32 %s27, 1
      %s29 = scalar_select %p26, %s27, %s28
      %p32 = pneg %p26
      %p33 = scmp.eq.s32.totalorder %s17, 1
      %p34 = por %p32, %p33
      %p35 = scmp.ne.s32.totalorder %s27, %s30
      %p36 = scmp.eq.s32.totalorder %s17, 0
      %p37 = por %p35, %p36
      %p38 = scmp.ne.s32.totalorder %s27, %s30
      %p39 = scmp.eq.s32.totalorder %s22, 1
      %p40 = por %p38, %p39
      %p41 = scmp.ne.s32.totalorder %s30, %s31
      %p42 = scmp.eq.s32.totalorder %s22, 0
      %p43 = por %p41, %p42
      %p44 = scmp.ne.s32.totalorder %s30, %s31
      %p45 = scmp.eq.s32.totalorder %s23, 1
      %p46 = por %p44, %p45
      %p48 = scmp.ne.s32.totalorder %s31, %s47
      %p49 = scmp.eq.s32.totalorder %s23, 0
      %p50 = por %p48, %p49
      %s52 = sadd.s32 %s51, 1
      %p55 = scmp.eq.s32.totalorder %s17, 1
      %p56 = scmp.ne.s32.totalorder %s51, %s53
      %p57 = scmp.eq.s32.totalorder %s17, 0
      %p58 = por %p56, %p57
      %p59 = scmp.ne.s32.totalorder %s51, %s53
      %p60 = scmp.eq.s32.totalorder %s22, 1
      %p61 = por %p59, %p60
      %p62 = scmp.ne.s32.totalorder %s53, %s54
      %p63 = scmp.eq.s32.totalorder %s22, 0
      %p64 = por %p62, %p63
      %p65 = scmp.ne.s32.totalorder %s53, %s54
      %p66 = scmp.eq.s32.totalorder %s23, 1
      %p67 = por %p65, %p66
      %p69 = scmp.ne.s32.totalorder %s54, %s68
      %p70 = scmp.eq.s32.totalorder %s23, 0
      %p71 = por %p69, %p70
      %s73 = sadd.s32 %s72, 1
      %p76 = scmp.eq.s32.totalorder %s17, 1
      %p77 = scmp.ne.s32.totalorder %s72, %s74
      %p78 = scmp.eq.s32.totalorder %s17, 0
      %p79 = por %p77, %p78
      %p80 = scmp.ne.s32.totalorder %s72, %s74
      %p81 = scmp.eq.s32.totalorder %s22, 1
      %p82 = por %p80, %p81
      %p83 = scmp.ne.s32.totalorder %s74, %s75
      %p84 = scmp.eq.s32.totalorder %s22, 0
      %p85 = por %p83, %p84
      %p86 = scmp.ne.s32.totalorder %s74, %s75
      %p87 = scmp.eq.s32.totalorder %s23, 1
      %p88 = por %p86, %p87
      %p90 = scmp.ne.s32.totalorder %s75, %s89
      %p91 = scmp.eq.s32.totalorder %s23, 0
      %p92 = por %p90, %p91
      %s94 = sadd.s32 %s93, 1
      %p97 = scmp.eq.s32.totalorder %s17, 1
      %p98 = scmp.ne.s32.totalorder %s93, %s95
      %p99 = scmp.eq.s32.totalorder %s17, 0
      %p100 = por %p98, %p99
      %p101 = scmp.ne.s32.totalorder %s93, %s95
      %p102 = scmp.eq.s32.totalorder %s22, 1
      %p103 = por %p101, %p102
      %p104 = scmp.ne.s32.totalorder %s95, %s96
      %p105 = scmp.eq.s32.totalorder %s22, 0
      %p106 = por %p104, %p105
      %p107 = scmp.ne.s32.totalorder %s95, %s96
      %p108 = scmp.eq.s32.totalorder %s23, 1
      %p109 = por %p107, %p108
      %p111 = scmp.ne.s32.totalorder %s96, %s110
      %p112 = scmp.eq.s32.totalorder %s23, 0
      %p113 = por %p111, %p112
      %s114 = ssub.s32 %s17, %s24
      %p115 = scmp.eq.s32.totalorder %s114, 0
      %s117 = sadd.s32 %s116, 1
      %s118 = scalar_select %p115, %s116, %s117
      %p121 = pneg %p115
      %p122 = scmp.eq.s32.totalorder %s17, 1
      %p123 = por %p121, %p122
      %p124 = scmp.ne.s32.totalorder %s116, %s119
      %p125 = scmp.eq.s32.totalorder %s17, 0
      %p126 = por %p124, %p125
      %p127 = scmp.ne.s32.totalorder %s116, %s119
      %p128 = scmp.eq.s32.totalorder %s22, 1
      %p129 = por %p127, %p128
      %p130 = scmp.ne.s32.totalorder %s119, %s120
      %p131 = scmp.eq.s32.totalorder %s22, 0
      %p132 = por %p130, %p131
      %p133 = scmp.ne.s32.totalorder %s119, %s120
      %p134 = scmp.eq.s32.totalorder %s23, 1
      %p135 = por %p133, %p134
      %p137 = scmp.ne.s32.totalorder %s120, %s136
      %p138 = scmp.eq.s32.totalorder %s23, 0
      %p139 = por %p137, %p138
      %p140 = scmp.le.s32.totalorder 1, %s17
      %p141 = scmp.lt.s32.totalorder %s17, 3
      %p142 = pnand %p140, %p141
      %p143 = pneg %p142
      // Predicated region
      $region9: #{tpu_custom_call.1} parent=5 // pred_check
        _
      $region10: #{tpu_custom_call.1} parent=5 // pred_check_branch
        %145 = sbr.rel (%p142) target = $region12
      $region11: #{tpu_custom_call.1} parent=5 // pred_region
        %s146 = ssub.s32 %s17, 1
        // Predicated region
        $region13: #{tpu_custom_call.1} parent=11 // pred_check
          %p147 = pneg %p64
        $region14: #{tpu_custom_call.1} parent=11 // pred_check_branch
          %149 = sbr.rel (%p147) target = $region16
        $region15: #{tpu_custom_call.1} parent=11 // pred_region
          %s151 = ssub.s32 288, 288
          %152 = vsyncadd [#allocation8], %s151
          %s153 = sshll.u32 [#allocation7], 4
          %s154 = int_to_ptr.vmem [resolvable:$true] %s153
          %159 = dma.hbm_to_vmem [thread:$0]  %s1, 288, %s154, [#allocation8], 32, 32, 2
        $region16: #{tpu_custom_call.1} parent=11 // pred_fallthru
          _
        // Predicated region
        $region17: #{tpu_custom_call.1} parent=11 // pred_check
          %p160 = pneg %p85
        $region18: #{tpu_custom_call.1} parent=11 // pred_check_branch
          %162 = sbr.rel (%p160) target = $region20
        $region19: #{tpu_custom_call.1} parent=11 // pred_region
          %s164 = ssub.s32 128, 128
          %165 = vsyncadd [#allocation8], %s164
          %s166 = sshll.u32 [#allocation9], 4
          %s167 = int_to_ptr.vmem [resolvable:$true] %s166
          %172 = dma.hbm_to_vmem [thread:$0]  %s2, 128, %s167, [#allocation8], 64, 64, 4
        $region20: #{tpu_custom_call.1} parent=11 // pred_fallthru
          _
        // Predicated region
        $region21: #{tpu_custom_call.1} parent=11 // pred_check
          %p173 = pneg %p106
        $region22: #{tpu_custom_call.1} parent=11 // pred_check_branch
          %175 = sbr.rel (%p173) target = $region24
        $region23: #{tpu_custom_call.1} parent=11 // pred_region
          _
        $region24: #{tpu_custom_call.1} parent=11 // pred_fallthru
          _
      $region12: #{tpu_custom_call.1} parent=5 // pred_fallthru
        _
      %p176 = scmp.lt.s32.totalorder %s17, 2
      // Predicated region
      $region25: #{tpu_custom_call.1} parent=5 // pred_check
        %p177 = pneg %p176
      $region26: #{tpu_custom_call.1} parent=5 // pred_check_branch
        %179 = sbr.rel (%p177) target = $region28
      $region27: #{tpu_custom_call.1} parent=5 // pred_region
        // Predicated region
        $region29: #{tpu_custom_call.1} parent=27 // pred_check
          %p180 = pneg %p37
        $region30: #{tpu_custom_call.1} parent=27 // pred_check_branch
          %182 = sbr.rel (%p180) target = $region32
        $region31: #{tpu_custom_call.1} parent=27 // pred_region
          %s183 = sand.u32 %s27, 1
          %s184 = scalar_lea.sflag [#allocation5], %s183
          %s185 = sand.u32 %s27, 1
          %s186 = smul.addr %s185, 8
          %s187 = scalar_lea.vmem [#allocation4], %s186
          %s189 = ssub.s32 128, 128
          %190 = vsyncadd %s184, %s189
          %s191 = smul.addr %s17, 2
          %s192 = smul.addr %s191, 64
          %s193 = scalar_lea.hbm %s0, %s192
          %s195 = sshll.u32 %s187, 4
          %s196 = int_to_ptr.vmem [resolvable:$true] %s195
          %198 = dma.hbm_to_vmem [thread:$0]  %s193, 128, %s196, %s184
        $region32: #{tpu_custom_call.1} parent=27 // pred_fallthru
          _
      $region28: #{tpu_custom_call.1} parent=5 // pred_fallthru
        _
      %p199 = scmp.le.s32.totalorder 1, %s17
      %p200 = scmp.lt.s32.totalorder %s17, 3
      %p201 = pnand %p199, %p200
      %p202 = pneg %p201
      // Predicated region
      $region33: #{tpu_custom_call.1} parent=5 // pred_check
        _
      $region34: #{tpu_custom_call.1} parent=5 // pred_check_branch
        %204 = sbr.rel (%p201) target = $region36
      $region35: #{tpu_custom_call.1} parent=5 // pred_region
        %s205 = ssub.s32 %s17, 1
        %s206 = sand.u32 %s30, 1
        %s207 = scalar_lea.sflag [#allocation5], %s206
        %s208 = sand.u32 %s30, 1
        %s209 = smul.addr %s208, 8
        %s210 = scalar_lea.vmem [#allocation4], %s209
        // Predicated region
        $region37: #{tpu_custom_call.1} parent=35 // pred_check
          %p211 = pneg %p43
        $region38: #{tpu_custom_call.1} parent=35 // pred_check_branch
          %213 = sbr.rel (%p211) target = $region40
        $region39: #{tpu_custom_call.1} parent=35 // pred_region
          %214 = dma.done %s207, 128
        $region40: #{tpu_custom_call.1} parent=35 // pred_fallthru
          _
        // Predicated region
        $region41: #{tpu_custom_call.1} parent=35 // pred_check
          %p215 = pneg %p64
        $region42: #{tpu_custom_call.1} parent=35 // pred_check_branch
          %217 = sbr.rel (%p215) target = $region44
        $region43: #{tpu_custom_call.1} parent=35 // pred_region
          %218 = dma.done [#allocation8], 288
        $region44: #{tpu_custom_call.1} parent=35 // pred_fallthru
          _
        // Predicated region
        $region45: #{tpu_custom_call.1} parent=35 // pred_check
          %p219 = pneg %p85
        $region46: #{tpu_custom_call.1} parent=35 // pred_check_branch
          %221 = sbr.rel (%p219) target = $region48
        $region47: #{tpu_custom_call.1} parent=35 // pred_region
          %222 = dma.done [#allocation8], 128
        $region48: #{tpu_custom_call.1} parent=35 // pred_fallthru
          _
        %s223 = sand.u32 %s30, 1
        %s224 = scalar_lea.sflag [#allocation5], %s223
        %s225 = sand.u32 %s30, 1
        %s226 = smul.addr %s225, 8
        %s227 = scalar_lea.vmem [#allocation4], %s226
        %p228 = pneg %p43
        %p229 = pneg %p40
        %p230 = pneg %p64
        %p231 = pneg %p61
        %p232 = pneg %p85
        %p233 = pneg %p82
        %p234 = pneg %p106
        %p235 = pneg %p103
        %p236 = pneg %p132
        %p237 = pneg %p129
        %s238 = sand.u32 %s119, 1
        %s239 = scalar_lea.sflag [#allocation6], %s238
        %s240 = sand.u32 %s119, 1
        %s241 = smul.addr %s240, 8
        %s242 = scalar_lea.vmem [#allocation10], %s241
        %245 = vst [vmem:[#allocation2 + $0x20] sm:$0xfc] 1065369472
        %246 = vst [vmem:[#allocation2 + $0x28] sm:$0xfc] 1065369472
        %247 = vst [vmem:[#allocation3 + $0x60] sm:$0xc0] 1065369472
        %248 = vst [vmem:[#allocation3 + $0x68] sm:$0xc0] 1065369472
        %v249 = vld [vmem:[#allocation9] sm:$0xf]
        %v250 = vld [vmem:[#allocation9 + $0x4] sm:$0x3]
        %v251 = vld [vmem:[%s3] sm:$0x3]
        %v252 = vld [vmem:[%s210] sm:$0xff]
        %v254 = vcombine.high %v252, %v252
        %256 = vrot.lane.b32.xlu0 %v252, 17
        %v257 = vpop.permute.xlu0 %256
        %258 = vrot.lane.b32.xlu0 %v254, 17
        %v259 = vpop.permute.xlu0 %258
        %v260 = vlaneseq
        %v261 = vand.u32 %v260, 127
        %vm262 = vcmp.lt.s32.totalorder %v261, 17
        %v263 = vsel %vm262, %v257, %v259
        %v264 = vsel %vm262, %v259, %v257
        %v265 = vld [vmem:[#allocation7] sm:$0x3]
        %v267 = vlaneseq
        %v268 = vshrl.u32 %v267, 7
        %v269 = vsub.s32 0, %v268
        %v270 = vrot.slane %v265, %v269
        %v271 = vlaneseq
        %v272 = vshrl.u32 %v271, 7
        %v273 = vsub.s32 1, %v272
        %v274 = vrot.slane %v265, %v273
        %v277 = vmul.f32 %v264, %v270
        %v278 = vmul.f32 %v263, %v274
        %v279 = vpack.c.bf16 %v277, %v277
        %v280 = vpack.c.bf16 %v278, %v278
        %281 = vst [vmem:[#allocation2] sm:$0x3] %v279
        %282 = vst [vmem:[#allocation2 + $0x8] sm:$0x3] %v280
        %283 = vrot.lane.b32.xlu0 %v252, 16
        %v284 = vpop.permute.xlu0 %283
        %285 = vrot.lane.b32.xlu0 %v254, 16
        %v286 = vpop.permute.xlu0 %285
        %vm287 = vcmp.lt.s32.totalorder %v261, 16
        %v288 = vsel %vm287, %v284, %v286
        %v289 = vsel %vm287, %v286, %v284
        %s290 = scalar_lea.vmem [#allocation7], 2
        %v291 = vld [vmem:[%s290] sm:$0x3]
        %v293 = vlaneseq
        %v294 = vshrl.u32 %v293, 7
        %v295 = vsub.s32 0, %v294
        %v296 = vrot.slane %v291, %v295
        %v297 = vlaneseq
        %v298 = vshrl.u32 %v297, 7
        %v299 = vsub.s32 1, %v298
        %v300 = vrot.slane %v291, %v299
        %v303 = vmul.f32 %v289, %v296
        %v304 = vmul.f32 %v288, %v300
        %v305 = vpack.c.bf16 %v303, %v303
        %v306 = vpack.c.bf16 %v304, %v304
        %v309 = vrot.slane %v305, 6
        %v310 = vrot.slane %v306, 6
        %313 = vst [vmem:[#allocation2] sm:$0xc] %v309
        %314 = vst [vmem:[#allocation2 + $0x8] sm:$0xc] %v310
        %315 = vrot.lane.b32.xlu0 %v252, 15
        %v316 = vpop.permute.xlu0 %315
        %317 = vrot.lane.b32.xlu0 %v254, 15
        %v318 = vpop.permute.xlu0 %317
        %vm319 = vcmp.lt.s32.totalorder %v261, 15
        %v320 = vsel %vm319, %v316, %v318
        %v321 = vsel %vm319, %v318, %v316
        %s322 = scalar_lea.vmem [#allocation7], 4
        %v323 = vld [vmem:[%s322] sm:$0x3]
        %v325 = vlaneseq
        %v326 = vshrl.u32 %v325, 7
        %v327 = vsub.s32 0, %v326
        %v328 = vrot.slane %v323, %v327
        %v329 = vlaneseq
        %v330 = vshrl.u32 %v329, 7
        %v331 = vsub.s32 1, %v330
        %v332 = vrot.slane %v323, %v331
        %v335 = vmul.f32 %v321, %v328
        %v336 = vmul.f32 %v320, %v332
        %v337 = vpack.c.bf16 %v335, %v335
        %v338 = vpack.c.bf16 %v336, %v336
        %v341 = vrot.slane %v337, 4
        %v342 = vrot.slane %v338, 4
        %345 = vst [vmem:[#allocation2] sm:$0x30] %v341
        %346 = vst [vmem:[#allocation2 + $0x8] sm:$0x30] %v342
        %347 = vrot.lane.b32.xlu0 %v252, 1
        %v348 = vpop.permute.xlu0 %347
        %349 = vrot.lane.b32.xlu0 %v254, 1
        %v350 = vpop.permute.xlu0 %349
        %vm351 = vcmp.lt.s32.totalorder %v261, 1
        %v352 = vsel %vm351, %v348, %v350
        %v353 = vsel %vm351, %v350, %v348
        %s354 = scalar_lea.vmem [#allocation7], 6
        %v355 = vld [vmem:[%s354] sm:$0x3]
        %v357 = vlaneseq
        %v358 = vshrl.u32 %v357, 7
        %v359 = vsub.s32 0, %v358
        %v360 = vrot.slane %v355, %v359
        %v361 = vlaneseq
        %v362 = vshrl.u32 %v361, 7
        %v363 = vsub.s32 1, %v362
        %v364 = vrot.slane %v355, %v363
        %v367 = vmul.f32 %v353, %v360
        %v368 = vmul.f32 %v352, %v364
        %v369 = vpack.c.bf16 %v367, %v367
        %v370 = vpack.c.bf16 %v368, %v368
        %v373 = vrot.slane %v369, 2
        %v374 = vrot.slane %v370, 2
        %377 = vst [vmem:[#allocation2] sm:$0xc0] %v373
        %378 = vst [vmem:[#allocation2 + $0x8] sm:$0xc0] %v374
        %s379 = scalar_lea.vmem [#allocation7], 8
        %v380 = vld [vmem:[%s379] sm:$0x3]
        %v382 = vlaneseq
        %v383 = vshrl.u32 %v382, 7
        %v384 = vsub.s32 0, %v383
        %v385 = vrot.slane %v380, %v384
        %v386 = vlaneseq
        %v387 = vshrl.u32 %v386, 7
        %v388 = vsub.s32 1, %v387
        %v389 = vrot.slane %v380, %v388
        %v390 = vcombine.low %v385, %v389
        %v392 = vmul.f32 %v252, %v390
        %v394 = vcombine.high %v392, %v392
        %v396 = vpack.c.bf16 %v392, %v392
        %v397 = vpack.c.bf16 %v394, %v394
        %398 = vst [vmem:[#allocation2 + $0x10] sm:$0x3] %v396
        %399 = vst [vmem:[#allocation2 + $0x18] sm:$0x3] %v397
        %400 = vrot.lane.b32.xlu0 %v252, 127
        %v401 = vpop.permute.xlu0 %400
        %402 = vrot.lane.b32.xlu0 %v254, 127
        %v403 = vpop.permute.xlu0 %402
        %vm404 = vcmp.lt.s32.totalorder %v261, 127
        %v405 = vsel %vm404, %v401, %v403
        %v406 = vsel %vm404, %v403, %v401
        %s407 = scalar_lea.vmem [#allocation7], 10
        %v408 = vld [vmem:[%s407] sm:$0x3]
        %v410 = vlaneseq
        %v411 = vshrl.u32 %v410, 7
        %v412 = vsub.s32 0, %v411
        %v413 = vrot.slane %v408, %v412
        %v414 = vlaneseq
        %v415 = vshrl.u32 %v414, 7
        %v416 = vsub.s32 1, %v415
        %v417 = vrot.slane %v408, %v416
        %v420 = vmul.f32 %v405, %v413
        %v421 = vmul.f32 %v406, %v417
        %v422 = vpack.c.bf16 %v420, %v420
        %v423 = vpack.c.bf16 %v421, %v421
        %v426 = vrot.slane %v422, 6
        %v427 = vrot.slane %v423, 6
        %430 = vst [vmem:[#allocation2 + $0x10] sm:$0xc] %v426
        %431 = vst [vmem:[#allocation2 + $0x18] sm:$0xc] %v427
        %432 = vrot.lane.b32.xlu0 %v252, 113
        %v433 = vpop.permute.xlu0 %432
        %434 = vrot.lane.b32.xlu0 %v254, 113
        %v435 = vpop.permute.xlu0 %434
        %vm436 = vcmp.lt.s32.totalorder %v261, 113
        %v437 = vsel %vm436, %v433, %v435
        %v438 = vsel %vm436, %v435, %v433
        %s439 = scalar_lea.vmem [#allocation7], 12
        %v440 = vld [vmem:[%s439] sm:$0x3]
        %v442 = vlaneseq
        %v443 = vshrl.u32 %v442, 7
        %v444 = vsub.s32 0, %v443
        %v445 = vrot.slane %v440, %v444
        %v446 = vlaneseq
        %v447 = vshrl.u32 %v446, 7
        %v448 = vsub.s32 1, %v447
        %v449 = vrot.slane %v440, %v448
        %v452 = vmul.f32 %v437, %v445
        %v453 = vmul.f32 %v438, %v449
        %v454 = vpack.c.bf16 %v452, %v452
        %v455 = vpack.c.bf16 %v453, %v453
        %v458 = vrot.slane %v454, 4
        %v459 = vrot.slane %v455, 4
        %462 = vst [vmem:[#allocation2 + $0x10] sm:$0x30] %v458
        %463 = vst [vmem:[#allocation2 + $0x18] sm:$0x30] %v459
        %464 = vrot.lane.b32.xlu0 %v252, 112
        %v465 = vpop.permute.xlu0 %464
        %466 = vrot.lane.b32.xlu0 %v254, 112
        %v467 = vpop.permute.xlu0 %466
        %vm468 = vcmp.lt.s32.totalorder %v261, 112
        %v469 = vsel %vm468, %v465, %v467
        %v470 = vsel %vm468, %v467, %v465
        %s471 = scalar_lea.vmem [#allocation7], 14
        %v472 = vld [vmem:[%s471] sm:$0x3]
        %v474 = vlaneseq
        %v475 = vshrl.u32 %v474, 7
        %v476 = vsub.s32 0, %v475
        %v477 = vrot.slane %v472, %v476
        %v478 = vlaneseq
        %v479 = vshrl.u32 %v478, 7
        %v480 = vsub.s32 1, %v479
        %v481 = vrot.slane %v472, %v480
        %v484 = vmul.f32 %v469, %v477
        %v485 = vmul.f32 %v470, %v481
        %v486 = vpack.c.bf16 %v484, %v484
        %v487 = vpack.c.bf16 %v485, %v485
        %v490 = vrot.slane %v486, 2
        %v491 = vrot.slane %v487, 2
        %494 = vst [vmem:[#allocation2 + $0x10] sm:$0xc0] %v490
        %495 = vst [vmem:[#allocation2 + $0x18] sm:$0xc0] %v491
        %496 = vrot.lane.b32.xlu0 %v252, 111
        %v497 = vpop.permute.xlu0 %496
        %498 = vrot.lane.b32.xlu0 %v254, 111
        %v499 = vpop.permute.xlu0 %498
        %vm500 = vcmp.lt.s32.totalorder %v261, 111
        %v501 = vsel %vm500, %v497, %v499
        %v502 = vsel %vm500, %v499, %v497
        %s503 = scalar_lea.vmem [#allocation7], 16
        %v504 = vld [vmem:[%s503] sm:$0x3]
        %v506 = vlaneseq
        %v507 = vshrl.u32 %v506, 7
        %v508 = vsub.s32 0, %v507
        %v509 = vrot.slane %v504, %v508
        %v510 = vlaneseq
        %v511 = vshrl.u32 %v510, 7
        %v512 = vsub.s32 1, %v511
        %v513 = vrot.slane %v504, %v512
        %v516 = vmul.f32 %v501, %v509
        %v517 = vmul.f32 %v502, %v513
        %v518 = vpack.c.bf16 %v516, %v516
        %v519 = vpack.c.bf16 %v517, %v517
        %520 = vst [vmem:[#allocation2 + $0x20] sm:$0x3] %v518
        %521 = vst [vmem:[#allocation2 + $0x28] sm:$0x3] %v519
        %v522 = vld [vmem:[#allocation2] sm:$0xff]
        %v523 = vld [vmem:[#allocation2 + $0x8] sm:$0xff]
        %v524 = vld [vmem:[#allocation2 + $0x10] sm:$0xff]
        %v525 = vld [vmem:[#allocation2 + $0x18] sm:$0xff]
        %v526 = vld [vmem:[#allocation2 + $0x20] sm:$0xff]
        %v527 = vld [vmem:[#allocation2 + $0x28] sm:$0xff]
        %v530 = vunpack.c.l.b16 %v249
        %v531 = vunpack.c.l.b16 %v250
        %v532 = vpack.c.b16 %v531, %v530
        %vm533 = vcmask 392192
        %v535 = vsel %vm533, %v532, 0
        %537 = vmatprep.subr.bf16.mxu0 %v523
        %538 = vmatpush1.bf16.msra.mxu0 %v522
        %539 = vmatprep.subr.bf16.mxu0 %v525
        %540 = vmatpush1.bf16.msra.mxu0 %v524
        %541 = vmatprep.subr.bf16.mxu0 %v527
        %542 = vmatpush1.bf16.msra.mxu0 %v526
        %543 = vmatprep.subr.bf16.mxu0 0
        %544 = vmatpush1.bf16.msra.mxu0 0
        %545 = vmatprep.subr.bf16.mxu0 0
        %546 = vmatpush1.bf16.msra.mxu0 0
        %547 = vmatprep.subr.bf16.mxu0 0
        %548 = vmatpush1.bf16.msra.mxu0 0
        %549 = vmatprep.subr.bf16.mxu0 0
        %550 = vmatpush1.bf16.msra.mxu0 0
        %551 = vmatprep.subr.bf16.mxu0 0
        %552 = vmatpush1.bf16.msra.mxu0 0
        %553 = vmatprep.subr.bf16.mxu0 0
        %554 = vmatpush1.bf16.msra.mxu0 0
        %555 = vmatprep.subr.bf16.mxu0 0
        %556 = vmatpush1.bf16.msra.mxu0 0
        %557 = vmatprep.subr.bf16.mxu0 0
        %558 = vmatpush1.bf16.msra.mxu0 0
        %559 = vmatprep.subr.bf16.mxu0 0
        %560 = vmatpush1.bf16.msra.mxu0 0
        %561 = vmatprep.subr.bf16.mxu0 0
        %562 = vmatpush1.bf16.msra.mxu0 0
        %563 = vmatprep.subr.bf16.mxu0 0
        %564 = vmatpush1.bf16.msra.mxu0 0
        %565 = vmatprep.subr.bf16.mxu0 0
        %566 = vmatpush1.bf16.msra.mxu0 0
        %567 = vmatprep.subr.bf16.mxu0 0
        %568 = vmatpush1.bf16.msra.mxu0 0
        %569 = vmatprep.mubr.bf16.mxu0 0
        %570 = vmatmul.mubr.bf16.gmra.mrb[0].mxu0 %v535
        %v571 = vpop.f32.mrb[0].mxu0
        %v572 = vadd.f32 0.0, %v571
        %v573 = vpop.f32.mrb[0].mxu0
        %v574 = vadd.f32 0.0, %v573
        %v575 = vpop.f32.mrb[0].mxu0
        %v576 = vadd.f32 0.0, %v575
        %v577 = vpop.f32.mrb[0].mxu0
        %v578 = vadd.f32 0.0, %v577
        %579 = vdwg.mxu0
        %v580 = vmax.f32 %v572, 0.0
        %v581 = vmax.f32 %v574, 0.0
        %v582 = vmax.f32 %v576, 0.0
        %v583 = vmax.f32 %v578, 0.0
        %584 = vrot.lane.b32.xlu0 %v580, 17
        %v585 = vpop.permute.xlu0 %584
        %586 = vrot.lane.b32.xlu0 %v582, 17
        %v587 = vpop.permute.xlu0 %586
        %588 = vrot.lane.b32.xlu0 %v581, 17
        %v589 = vpop.permute.xlu0 %588
        %590 = vrot.lane.b32.xlu0 %v583, 17
        %v591 = vpop.permute.xlu0 %590
        %v592 = vsel %vm262, %v585, %v589
        %v593 = vsel %vm262, %v587, %v591
        %v594 = vsel %vm262, %v589, %v585
        %v595 = vsel %vm262, %v591, %v587
        %v596 = vld [vmem:[#allocation7] sm:$0x3]
        %v598 = vlaneseq
        %v599 = vshrl.u32 %v598, 7
        %v600 = vsub.s32 0, %v599
        %v601 = vrot.slane %v596, %v600
        %v602 = vlaneseq
        %v603 = vshrl.u32 %v602, 7
        %v604 = vsub.s32 1, %v603
        %v605 = vrot.slane %v596, %v604
        %v608 = vmul.f32 %v594, %v601
        %v609 = vmul.f32 %v592, %v605
        %v610 = vmul.f32 %v595, %v601
        %v611 = vmul.f32 %v593, %v605
        %v612 = vpack.c.bf16 %v610, %v608
        %v613 = vpack.c.bf16 %v611, %v609
        %614 = vst [vmem:[#allocation3] sm:$0x3f] %v612
        %615 = vst [vmem:[#allocation3 + $0x8] sm:$0x3f] %v613
        %616 = vrot.lane.b32.xlu0 %v580, 16
        %v617 = vpop.permute.xlu0 %616
        %618 = vrot.lane.b32.xlu0 %v582, 16
        %v619 = vpop.permute.xlu0 %618
        %620 = vrot.lane.b32.xlu0 %v581, 16
        %v621 = vpop.permute.xlu0 %620
        %622 = vrot.lane.b32.xlu0 %v583, 16
        %v623 = vpop.permute.xlu0 %622
        %v624 = vsel %vm287, %v617, %v621
        %v625 = vsel %vm287, %v619, %v623
        %v626 = vsel %vm287, %v621, %v617
        %v627 = vsel %vm287, %v623, %v619
        %v628 = vld [vmem:[%s290] sm:$0x3]
        %v630 = vlaneseq
        %v631 = vshrl.u32 %v630, 7
        %v632 = vsub.s32 0, %v631
        %v633 = vrot.slane %v628, %v632
        %v634 = vlaneseq
        %v635 = vshrl.u32 %v634, 7
        %v636 = vsub.s32 1, %v635
        %v637 = vrot.slane %v628, %v636
        %v640 = vmul.f32 %v626, %v633
        %v641 = vmul.f32 %v624, %v637
        %v642 = vmul.f32 %v627, %v633
        %v643 = vmul.f32 %v625, %v637
        %v644 = vpack.c.bf16 %v642, %v640
        %v645 = vpack.c.bf16 %v643, %v641
        %v648 = vrot.slane %v644, 2
        %v649 = vrot.slane %v645, 2
        %652 = vst [vmem:[#allocation3] sm:$0xc0] %v648
        %653 = vst [vmem:[#allocation3 + $0x8] sm:$0xc0] %v649
        %654 = vst [vmem:[#allocation3 + $0x10] sm:$0xf] %v648
        %655 = vst [vmem:[#allocation3 + $0x18] sm:$0xf] %v649
        %656 = vrot.lane.b32.xlu0 %v580, 15
        %v657 = vpop.permute.xlu0 %656
        %658 = vrot.lane.b32.xlu0 %v582, 15
        %v659 = vpop.permute.xlu0 %658
        %660 = vrot.lane.b32.xlu0 %v581, 15
        %v661 = vpop.permute.xlu0 %660
        %662 = vrot.lane.b32.xlu0 %v583, 15
        %v663 = vpop.permute.xlu0 %662
        %v664 = vsel %vm319, %v657, %v661
        %v665 = vsel %vm319, %v659, %v663
        %v666 = vsel %vm319, %v661, %v657
        %v667 = vsel %vm319, %v663, %v659
        %v668 = vld [vmem:[%s322] sm:$0x3]
        %v670 = vlaneseq
        %v671 = vshrl.u32 %v670, 7
        %v672 = vsub.s32 0, %v671
        %v673 = vrot.slane %v668, %v672
        %v674 = vlaneseq
        %v675 = vshrl.u32 %v674, 7
        %v676 = vsub.s32 1, %v675
        %v677 = vrot.slane %v668, %v676
        %v680 = vmul.f32 %v666, %v673
        %v681 = vmul.f32 %v664, %v677
        %v682 = vmul.f32 %v667, %v673
        %v683 = vmul.f32 %v665, %v677
        %v684 = vpack.c.bf16 %v682, %v680
        %v685 = vpack.c.bf16 %v683, %v681
        %v688 = vrot.slane %v684, 4
        %v689 = vrot.slane %v685, 4
        %692 = vst [vmem:[#allocation3 + $0x10] sm:$0xf0] %v688
        %693 = vst [vmem:[#allocation3 + $0x18] sm:$0xf0] %v689
        %694 = vst [vmem:[#allocation3 + $0x20] sm:$0x3] %v688
        %695 = vst [vmem:[#allocation3 + $0x28] sm:$0x3] %v689
        %696 = vrot.lane.b32.xlu0 %v580, 1
        %v697 = vpop.permute.xlu0 %696
        %698 = vrot.lane.b32.xlu0 %v582, 1
        %v699 = vpop.permute.xlu0 %698
        %700 = vrot.lane.b32.xlu0 %v581, 1
        %v701 = vpop.permute.xlu0 %700
        %702 = vrot.lane.b32.xlu0 %v583, 1
        %v703 = vpop.permute.xlu0 %702
        %v704 = vsel %vm351, %v697, %v701
        %v705 = vsel %vm351, %v699, %v703
        %v706 = vsel %vm351, %v701, %v697
        %v707 = vsel %vm351, %v703, %v699
        %v708 = vld [vmem:[%s354] sm:$0x3]
        %v710 = vlaneseq
        %v711 = vshrl.u32 %v710, 7
        %v712 = vsub.s32 0, %v711
        %v713 = vrot.slane %v708, %v712
        %v714 = vlaneseq
        %v715 = vshrl.u32 %v714, 7
        %v716 = vsub.s32 1, %v715
        %v717 = vrot.slane %v708, %v716
        %v720 = vmul.f32 %v706, %v713
        %v721 = vmul.f32 %v704, %v717
        %v722 = vmul.f32 %v707, %v713
        %v723 = vmul.f32 %v705, %v717
        %v724 = vpack.c.bf16 %v722, %v720
        %v725 = vpack.c.bf16 %v723, %v721
        %v728 = vrot.slane %v724, 6
        %v729 = vrot.slane %v725, 6
        %732 = vst [vmem:[#allocation3 + $0x20] sm:$0xfc] %v728
        %733 = vst [vmem:[#allocation3 + $0x28] sm:$0xfc] %v729
        %v734 = vld [vmem:[%s379] sm:$0x3]
        %v736 = vlaneseq
        %v737 = vshrl.u32 %v736, 7
        %v738 = vsub.s32 0, %v737
        %v739 = vrot.slane %v734, %v738
        %v740 = vlaneseq
        %v741 = vshrl.u32 %v740, 7
        %v742 = vsub.s32 1, %v741
        %v743 = vrot.slane %v734, %v742
        %v746 = vmul.f32 %v580, %v739
        %v747 = vmul.f32 %v581, %v743
        %v748 = vmul.f32 %v582, %v739
        %v749 = vmul.f32 %v583, %v743
        %v750 = vpack.c.bf16 %v748, %v746
        %v751 = vpack.c.bf16 %v749, %v747
        %752 = vst [vmem:[#allocation3 + $0x30] sm:$0x3f] %v750
        %753 = vst [vmem:[#allocation3 + $0x38] sm:$0x3f] %v751
        %754 = vrot.lane.b32.xlu0 %v580, 127
        %v755 = vpop.permute.xlu0 %754
        %756 = vrot.lane.b32.xlu0 %v582, 127
        %v757 = vpop.permute.xlu0 %756
        %758 = vrot.lane.b32.xlu0 %v581, 127
        %v759 = vpop.permute.xlu0 %758
        %760 = vrot.lane.b32.xlu0 %v583, 127
        %v761 = vpop.permute.xlu0 %760
        %v762 = vsel %vm404, %v755, %v759
        %v763 = vsel %vm404, %v757, %v761
        %v764 = vsel %vm404, %v759, %v755
        %v765 = vsel %vm404, %v761, %v757
        %v766 = vld [vmem:[%s407] sm:$0x3]
        %v768 = vlaneseq
        %v769 = vshrl.u32 %v768, 7
        %v770 = vsub.s32 0, %v769
        %v771 = vrot.slane %v766, %v770
        %v772 = vlaneseq
        %v773 = vshrl.u32 %v772, 7
        %v774 = vsub.s32 1, %v773
        %v775 = vrot.slane %v766, %v774
        %v778 = vmul.f32 %v762, %v771
        %v779 = vmul.f32 %v764, %v775
        %v780 = vmul.f32 %v763, %v771
        %v781 = vmul.f32 %v765, %v775
        %v782 = vpack.c.bf16 %v780, %v778
        %v783 = vpack.c.bf16 %v781, %v779
        %v786 = vrot.slane %v782, 2
        %v787 = vrot.slane %v783, 2
        %790 = vst [vmem:[#allocation3 + $0x30] sm:$0xc0] %v786
        %791 = vst [vmem:[#allocation3 + $0x38] sm:$0xc0] %v787
        %792 = vst [vmem:[#allocation3 + $0x40] sm:$0xf] %v786
        %793 = vst [vmem:[#allocation3 + $0x48] sm:$0xf] %v787
        %794 = vrot.lane.b32.xlu0 %v580, 113
        %v795 = vpop.permute.xlu0 %794
        %796 = vrot.lane.b32.xlu0 %v582, 113
        %v797 = vpop.permute.xlu0 %796
        %798 = vrot.lane.b32.xlu0 %v581, 113
        %v799 = vpop.permute.xlu0 %798
        %800 = vrot.lane.b32.xlu0 %v583, 113
        %v801 = vpop.permute.xlu0 %800
        %v802 = vsel %vm436, %v795, %v799
        %v803 = vsel %vm436, %v797, %v801
        %v804 = vsel %vm436, %v799, %v795
        %v805 = vsel %vm436, %v801, %v797
        %v806 = vld [vmem:[%s439] sm:$0x3]
        %v808 = vlaneseq
        %v809 = vshrl.u32 %v808, 7
        %v810 = vsub.s32 0, %v809
        %v811 = vrot.slane %v806, %v810
        %v812 = vlaneseq
        %v813 = vshrl.u32 %v812, 7
        %v814 = vsub.s32 1, %v813
        %v815 = vrot.slane %v806, %v814
        %v818 = vmul.f32 %v802, %v811
        %v819 = vmul.f32 %v804, %v815
        %v820 = vmul.f32 %v803, %v811
        %v821 = vmul.f32 %v805, %v815
        %v822 = vpack.c.bf16 %v820, %v818
        %v823 = vpack.c.bf16 %v821, %v819
        %v826 = vrot.slane %v822, 4
        %v827 = vrot.slane %v823, 4
        %830 = vst [vmem:[#allocation3 + $0x40] sm:$0xf0] %v826
        %831 = vst [vmem:[#allocation3 + $0x48] sm:$0xf0] %v827
        %832 = vst [vmem:[#allocation3 + $0x50] sm:$0x3] %v826
        %833 = vst [vmem:[#allocation3 + $0x58] sm:$0x3] %v827
        %834 = vrot.lane.b32.xlu0 %v580, 112
        %v835 = vpop.permute.xlu0 %834
        %836 = vrot.lane.b32.xlu0 %v582, 112
        %v837 = vpop.permute.xlu0 %836
        %838 = vrot.lane.b32.xlu0 %v581, 112
        %v839 = vpop.permute.xlu0 %838
        %840 = vrot.lane.b32.xlu0 %v583, 112
        %v841 = vpop.permute.xlu0 %840
        %v842 = vsel %vm468, %v835, %v839
        %v843 = vsel %vm468, %v837, %v841
        %v844 = vsel %vm468, %v839, %v835
        %v845 = vsel %vm468, %v841, %v837
        %v846 = vld [vmem:[%s471] sm:$0x3]
        %v848 = vlaneseq
        %v849 = vshrl.u32 %v848, 7
        %v850 = vsub.s32 0, %v849
        %v851 = vrot.slane %v846, %v850
        %v852 = vlaneseq
        %v853 = vshrl.u32 %v852, 7
        %v854 = vsub.s32 1, %v853
        %v855 = vrot.slane %v846, %v854
        %v858 = vmul.f32 %v842, %v851
        %v859 = vmul.f32 %v844, %v855
        %v860 = vmul.f32 %v843, %v851
        %v861 = vmul.f32 %v845, %v855
        %v862 = vpack.c.bf16 %v860, %v858
        %v863 = vpack.c.bf16 %v861, %v859
        %v866 = vrot.slane %v862, 6
        %v867 = vrot.slane %v863, 6
        %870 = vst [vmem:[#allocation3 + $0x50] sm:$0xfc] %v866
        %871 = vst [vmem:[#allocation3 + $0x58] sm:$0xfc] %v867
        %872 = vrot.lane.b32.xlu0 %v580, 111
        %v873 = vpop.permute.xlu0 %872
        %874 = vrot.lane.b32.xlu0 %v582, 111
        %v875 = vpop.permute.xlu0 %874
        %876 = vrot.lane.b32.xlu0 %v581, 111
        %v877 = vpop.permute.xlu0 %876
        %878 = vrot.lane.b32.xlu0 %v583, 111
        %v879 = vpop.permute.xlu0 %878
        %v880 = vsel %vm500, %v873, %v877
        %v881 = vsel %vm500, %v875, %v879
        %v882 = vsel %vm500, %v877, %v873
        %v883 = vsel %vm500, %v879, %v875
        %v884 = vld [vmem:[%s503] sm:$0x3]
        %v886 = vlaneseq
        %v887 = vshrl.u32 %v886, 7
        %v888 = vsub.s32 0, %v887
        %v889 = vrot.slane %v884, %v888
        %v890 = vlaneseq
        %v891 = vshrl.u32 %v890, 7
        %v892 = vsub.s32 1, %v891
        %v893 = vrot.slane %v884, %v892
        %v896 = vmul.f32 %v880, %v889
        %v897 = vmul.f32 %v882, %v893
        %v898 = vmul.f32 %v881, %v889
        %v899 = vmul.f32 %v883, %v893
        %v900 = vpack.c.bf16 %v898, %v896
        %v901 = vpack.c.bf16 %v899, %v897
        %902 = vst [vmem:[#allocation3 + $0x60] sm:$0x3f] %v900
        %903 = vst [vmem:[#allocation3 + $0x68] sm:$0x3f] %v901
        %v904 = vld [vmem:[#allocation3] sm:$0xff]
        %v905 = vld [vmem:[#allocation3 + $0x8] sm:$0xff]
        %v906 = vld [vmem:[#allocation3 + $0x10] sm:$0xff]
        %v907 = vld [vmem:[#allocation3 + $0x18] sm:$0xff]
        %v908 = vld [vmem:[#allocation3 + $0x20] sm:$0xff]
        %v909 = vld [vmem:[#allocation3 + $0x28] sm:$0xff]
        %v910 = vld [vmem:[#allocation3 + $0x30] sm:$0xff]
        %v911 = vld [vmem:[#allocation3 + $0x38] sm:$0xff]
        %v912 = vld [vmem:[#allocation3 + $0x40] sm:$0xff]
        %v913 = vld [vmem:[#allocation3 + $0x48] sm:$0xff]
        %v914 = vld [vmem:[#allocation3 + $0x50] sm:$0xff]
        %v915 = vld [vmem:[#allocation3 + $0x58] sm:$0xff]
        %v916 = vld [vmem:[#allocation3 + $0x60] sm:$0xff]
        %v917 = vld [vmem:[#allocation3 + $0x68] sm:$0xff]
        %vm918 = vcmask 916480
        %v920 = vsel %vm918, %v251, 0
        %922 = vmatprep.subr.bf16.mxu0 %v905
        %923 = vmatpush1.bf16.msra.mxu0 %v904
        %924 = vmatprep.subr.bf16.mxu0 %v907
        %925 = vmatpush1.bf16.msra.mxu0 %v906
        %926 = vmatprep.subr.bf16.mxu0 %v909
        %927 = vmatpush1.bf16.msra.mxu0 %v908
        %928 = vmatprep.subr.bf16.mxu0 %v911
        %929 = vmatpush1.bf16.msra.mxu0 %v910
        %930 = vmatprep.subr.bf16.mxu0 %v913
        %931 = vmatpush1.bf16.msra.mxu0 %v912
        %932 = vmatprep.subr.bf16.mxu0 %v915
        %933 = vmatpush1.bf16.msra.mxu0 %v914
        %934 = vmatprep.subr.bf16.mxu0 %v917
        %935 = vmatpush1.bf16.msra.mxu0 %v916
        %936 = vmatprep.subr.bf16.mxu0 0
        %937 = vmatpush1.bf16.msra.mxu0 0
        %938 = vmatprep.subr.bf16.mxu0 0
        %939 = vmatpush1.bf16.msra.mxu0 0
        %940 = vmatprep.subr.bf16.mxu0 0
        %941 = vmatpush1.bf16.msra.mxu0 0
        %942 = vmatprep.subr.bf16.mxu0 0
        %943 = vmatpush1.bf16.msra.mxu0 0
        %944 = vmatprep.subr.bf16.mxu0 0
        %945 = vmatpush1.bf16.msra.mxu0 0
        %946 = vmatprep.subr.bf16.mxu0 0
        %947 = vmatpush1.bf16.msra.mxu0 0
        %948 = vmatprep.subr.bf16.mxu0 0
        %949 = vmatpush1.bf16.msra.mxu0 0
        %950 = vmatprep.subr.bf16.mxu0 0
        %951 = vmatpush1.bf16.msra.mxu0 0
        %952 = vmatprep.subr.bf16.mxu0 0
        %953 = vmatpush1.bf16.msra.mxu0 0
        %954 = vmatprep.mubr.bf16.mxu0 0
        %955 = vmatmul.mubr.bf16.gmra.mrb[0].mxu0 %v920
        %v956 = vpop.f32.mrb[0].mxu0
        %v957 = vadd.f32 %v252, %v956
        %v958 = vpop.f32.mrb[0].mxu0
        %v959 = vadd.f32 %v254, %v958
        %v960 = vpop.f32.mrb[0].mxu0
        %v961 = vpop.f32.mrb[0].mxu0
        %962 = vdwg.mxu0
        %v965 = vcombine.low %v957, %v959
        %967 = vst [vmem:[%s242] sm:$0xff] %v965
        %s968 = sand.u32 %s119, 1
        %s969 = scalar_lea.sflag [#allocation6], %s968
        %s970 = sand.u32 %s119, 1
        %s971 = smul.addr %s970, 8
        %s972 = scalar_lea.vmem [#allocation10], %s971
        // Predicated region
        $region49: #{tpu_custom_call.1} parent=35 // pred_check
          %p973 = pneg %p129
        $region50: #{tpu_custom_call.1} parent=35 // pred_check_branch
          %975 = sbr.rel (%p973) target = $region52
        $region51: #{tpu_custom_call.1} parent=35 // pred_region
          %s977 = ssub.s32 128, 128
          %978 = vsyncadd %s969, %s977
          %s979 = smul.addr %s22, 2
          %s980 = smul.addr %s979, 64
          %s981 = scalar_lea.hbm %s4, %s980
          %s983 = sshll.u32 %s972, 4
          %s984 = int_to_ptr.vmem [resolvable:$true] %s983
          %986 = dma.vmem_to_hbm [thread:$0]  %s984, 128, %s981, %s969
        $region52: #{tpu_custom_call.1} parent=35 // pred_fallthru
          _
      $region36: #{tpu_custom_call.1} parent=5 // pred_fallthru
        _
      %p987 = scmp.le.s32.totalorder 2, %s17
      // Predicated region
      $region53: #{tpu_custom_call.1} parent=5 // pred_check
        %p988 = pneg %p987
      $region54: #{tpu_custom_call.1} parent=5 // pred_check_branch
        %990 = sbr.rel (%p988) target = $region56
      $region55: #{tpu_custom_call.1} parent=5 // pred_region
        %s991 = ssub.s32 %s17, 2
        // Predicated region
        $region57: #{tpu_custom_call.1} parent=55 // pred_check
          %p992 = pneg %p135
        $region58: #{tpu_custom_call.1} parent=55 // pred_check_branch
          %994 = sbr.rel (%p992) target = $region60
        $region59: #{tpu_custom_call.1} parent=55 // pred_region
          %s995 = sand.u32 %s120, 1
          %s996 = scalar_lea.sflag [#allocation6], %s995
          %s997 = sand.u32 %s120, 1
          %s998 = smul.addr %s997, 8
          %s999 = scalar_lea.vmem [#allocation10], %s998
          %1000 = dma.done %s996, 128
        $region60: #{tpu_custom_call.1} parent=55 // pred_fallthru
          _
      $region56: #{tpu_custom_call.1} parent=5 // pred_fallthru
        _
    $region6: #{tpu_custom_call.1} parent=1 // loop_footer
      %s21 = sadd.s32 1, %s17
    $region7: #{tpu_custom_call.1} parent=1 // loop_footer_branch
      %16 = sbr.rel target = $region3
    $region8: #{tpu_custom_call.1} parent=1 // loop_exit
      _
    %1001 = vsyncpa [#allocation5], 1
    %s1002 = scalar_lea.sflag [#allocation5], 1
    %1003 = vsyncpa %s1002, 1
    %1004 = vsyncpa [#allocation8], 1
    %1005 = vsyncpa [#allocation6], 1
    %s1006 = scalar_lea.sflag [#allocation6], 1
    %1007 = vsyncpa %s1006, 1

</llo_original>
